<compile_context>
chip_gen: v7x
topology: tpu7x:2x2x1
jax: 0.10.0
libtpu: 0.0.40
codegen_flags: <defaults>
</compile_context>

<pallas_src>
import numpy as np
import jax
import jax.numpy as jnp
from jax.experimental import pallas as pl
from jax.experimental.pallas import tpu as pltpu

LN_EPS = 1e-5               # torch.nn.LayerNorm default eps
PACK = 8                    # logical rows packed per kernel row (lane-dense I/O)
TILE_PACKED_ROWS = 1024     # 1024 packed rows = 8192 logical rows per grid step


def _cdiv(a: int, b: int) -> int:
    return -(-a // b)


def _round_up(a: int, b: int) -> int:
    return _cdiv(a, b) * b


def _interp_matrix(c_in: int, c_out: int) -> np.ndarray:
    """Matrix W such that (x @ W) == F.interpolate(x[:,None,:], c_out,
    mode='linear', align_corners=True)[:,0,:]."""
    W = np.zeros((c_in, c_out), dtype=np.float32)
    if c_in == c_out:
        np.fill_diagonal(W, 1.0)
        return W
    if c_out == 1:
        W[0, 0] = 1.0
        return W
    scale = (c_in - 1) / (c_out - 1)
    for j in range(c_out):
        pos = j * scale
        i0 = min(int(np.floor(pos)), c_in - 1)
        i1 = min(i0 + 1, c_in - 1)
        frac = pos - i0
        W[i0, j] += 1.0 - frac
        W[i1, j] += frac
    return W


def _default_matmul_dtype(x_dtype):
    """Chip-aware MXU operand dtype: bf16 on chips that emulate f32 matmuls
    (v5e, v7x), otherwise keep the activation dtype."""
    if jnp.dtype(x_dtype) == jnp.dtype(jnp.bfloat16):
        return jnp.dtype(jnp.bfloat16)
    try:
        kind = jax.devices()[0].device_kind.lower()
    except Exception:
        return jnp.dtype(x_dtype)
    if "v5" in kind or "v7" in kind:
        return jnp.dtype(jnp.bfloat16)
    return jnp.dtype(x_dtype)


def _resample_norm_kernel(x_ref, wc_ref, p_ref, gamma_ref, beta_ref, o_ref):
    # x_ref:     (tile_p, PACK*C_in)     packed activations (lane-dense)
    # wc_ref:    (PACK*C_in, PACK*C_out) block-diag interp matrix with the
    #            trainable-add gate AND the LayerNorm mean subtraction folded in
    # p_ref:     (PACK*C_out, PACK*C_out) block-diag per-group averaging matrix
    # gamma/beta:(1, PACK*C_out)         LayerNorm affine params, tiled per group
    w = wc_ref[...]
    p = p_ref[...]
    x = x_ref[...].astype(w.dtype)

    # Resample (+ gate) AND mean subtraction in one MXU matmul, f32 accumulation.
    centered = jnp.dot(x, w, preferred_element_type=jnp.float32)

    # Segmented LayerNorm variance: per-32-lane-group mean of centered^2,
    # broadcast back to its lanes via the block-diagonal averaging matmul.
    c2 = (centered * centered).astype(p.dtype)
    var = jnp.dot(c2, p, preferred_element_type=jnp.float32)
    inv = jax.lax.rsqrt(var + LN_EPS)
    o_ref[...] = (centered * inv * gamma_ref[...] + beta_ref[...]).astype(o_ref.dtype)


def resample_norm(x, w_interp, mask, gamma, beta, *, matmul_dtype=None):
    """x: (B, T, C_in) -> (B, T, C_out). Hot path in one tiled Pallas kernel."""
    B, T, C_in = x.shape
    C_out = w_interp.shape[1]
    N = B * T
    lanes_in = PACK * C_in
    lanes_out = PACK * C_out

    mm_dtype = (jnp.dtype(matmul_dtype) if matmul_dtype is not None
                else _default_matmul_dtype(x.dtype))

    # ---- one-time parameter folding on the tiny (C_in, C_out) weights ----
    gate = jax.nn.sigmoid(mask.astype(jnp.float32)) * 2.0             # (C_out,)
    w_eff = w_interp.astype(jnp.float32) * gate[None, :]              # (C_in, C_out)
    # Fold the LayerNorm mean subtraction: centered = x @ (w_eff @ (I - J/C_out)).
    w_c_small = w_eff - jnp.mean(w_eff, axis=1, keepdims=True)        # (C_in, C_out)
    w_big = jnp.kron(jnp.eye(PACK, dtype=jnp.float32), w_c_small).astype(mm_dtype)
    p_avg = jnp.kron(jnp.eye(PACK, dtype=jnp.float32),
                     jnp.full((C_out, C_out), 1.0 / C_out, dtype=jnp.float32)
                     ).astype(mm_dtype)
    gamma_p = jnp.tile(gamma.astype(jnp.float32), PACK).reshape(1, lanes_out)
    beta_p = jnp.tile(beta.astype(jnp.float32), PACK).reshape(1, lanes_out)

    # ---- pack PACK logical rows per lane-dense kernel row (metadata reshape) ----
    x2d = x.reshape(N, C_in)
    n_p_needed = _cdiv(N, PACK)
    # >= 2 grid tiles for medium inputs (v7x megacore split); multiple of 8 for
    # sublane alignment; capped so VMEM fits every generation's scoped default.
    tile_p = min(TILE_PACKED_ROWS, _round_up(_cdiv(n_p_needed, 2), 8))
    n_tiles = _cdiv(n_p_needed, tile_p)
    n_p = n_tiles * tile_p                              # padded packed-row count
    n_pad = n_p * PACK
    if n_pad != N:
        # Padded tail rows are all-zero: var=0 -> inv=rsqrt(LN_EPS) is large but
        # finite on rows that are sliced off below (would only blow up if
        # LN_EPS were ever set to 0).
        x2d = jnp.pad(x2d, ((0, n_pad - N), (0, 0)))
    x_packed = x2d.reshape(n_p, lanes_in)

    itemsize = jnp.dtype(x.dtype).itemsize
    flops = 2 * n_p * (lanes_in * lanes_out + lanes_out * lanes_out)
    transcendentals = n_p * lanes_out                   # rsqrt on every lane
    bytes_accessed = (n_p * lanes_in * itemsize          # activations in
                      + n_p * lanes_out * itemsize       # activations out
                      + w_big.size * w_big.dtype.itemsize
                      + p_avg.size * p_avg.dtype.itemsize
                      + 2 * lanes_out * 4)

    out_packed = pl.pallas_call(
        _resample_norm_kernel,
        out_shape=jax.ShapeDtypeStruct((n_p, lanes_out), x.dtype),
        grid=(n_tiles,),
        in_specs=[
            pl.BlockSpec((tile_p, lanes_in), lambda i: (i, 0)),
            pl.BlockSpec((lanes_in, lanes_out), lambda i: (0, 0)),
            pl.BlockSpec((lanes_out, lanes_out), lambda i: (0, 0)),
            pl.BlockSpec((1, lanes_out), lambda i: (0, 0)),
            pl.BlockSpec((1, lanes_out), lambda i: (0, 0)),
        ],
        out_specs=pl.BlockSpec((tile_p, lanes_out), lambda i: (i, 0)),
        compiler_params=pltpu.CompilerParams(
            dimension_semantics=("parallel",),
            vmem_limit_bytes=32 * 1024 * 1024),
        cost_estimate=pl.CostEstimate(
            flops=flops, transcendentals=transcendentals,
            bytes_accessed=bytes_accessed),
    )(x_packed, w_big, p_avg, gamma_p, beta_p)

    # Unpack: (n_p, PACK*C_out) has identical row-major bytes to (n_pad, C_out).
    out2d = out_packed.reshape(n_pad, C_out)[:N]
    return out2d.reshape(B, T, C_out)


def resample_norm_ref(x, w_interp, mask, gamma, beta):
    """Pure-JAX reference of the same forward pass (module semantics)."""
    B, T, C_in = x.shape
    C_out = w_interp.shape[1]
    y = x.reshape(-1, C_in).astype(jnp.float32) @ w_interp
    y = y * (jax.nn.sigmoid(mask) * 2.0)
    mean = jnp.mean(y, axis=-1, keepdims=True)
    var = jnp.mean((y - mean) ** 2, axis=-1, keepdims=True)
    y = (y - mean) / jnp.sqrt(var + LN_EPS)
    y = y * gamma + beta
    return y.reshape(B, T, C_out)


if __name__ == "__main__":
    # Module config: ResampleNorm(input_size=16, output_size=32, trainable_add=True)
    B, T = 2, 8
    input_size, output_size = 16, 32

    key = jax.random.PRNGKey(0)
    x = jax.random.normal(key, (B, T, input_size), dtype=jnp.float32)

    # Deterministic parameter init per the module's __init__:
    #   mask = zeros(output_size) (trainable_add), LayerNorm weight=1, bias=0
    mask = jnp.zeros((output_size,), dtype=jnp.float32)
    gamma = jnp.ones((output_size,), dtype=jnp.float32)
    beta = jnp.zeros((output_size,), dtype=jnp.float32)

    # Fixed linear-interpolation (align_corners=True) matrix for the resample.
    w_interp = jnp.asarray(_interp_matrix(input_size, output_size))

    ref = resample_norm_ref(x, w_interp, mask, gamma, beta)

    # Exact-precision path (f32 MXU operands): tight tolerance.
    out = resample_norm(x, w_interp, mask, gamma, beta, matmul_dtype=jnp.float32)
    out = jax.block_until_ready(out)
    assert out.shape == (B, T, output_size)
    assert jnp.allclose(out, ref, atol=1e-4, rtol=1e-4)

    # bf16-operand path (recommended for f32 activations on v5e / v7x where
    # f32 matmuls are MXU-emulated): looser tolerance for bf16 rounding.
    out_bf16 = resample_norm(x, w_interp, mask, gamma, beta,
                             matmul_dtype=jnp.bfloat16)
    out_bf16 = jax.block_until_ready(out_bf16)
    assert jnp.allclose(out_bf16, ref, atol=5e-2, rtol=5e-2)

    # Chip-aware default (picks one of the two paths above).
    out_def = resample_norm(x, w_interp, mask, gamma, beta)
    out_def = jax.block_until_ready(out_def)
    assert jnp.allclose(out_def, ref, atol=5e-2, rtol=5e-2)

    print("KERNEL_OK")
</pallas_src>

<mosaic_0001>
module attributes {stable_mosaic.version = 11 : i64} {
  func.func @_resample_norm_kernel(%arg0: i32, %arg1: memref<8x128xf32, #tpu.memory_space<vmem>>, %arg2: memref<128x256xf32, #tpu.memory_space<vmem>>, %arg3: memref<256x256xf32, #tpu.memory_space<vmem>>, %arg4: memref<1x256xf32, #tpu.memory_space<vmem>>, %arg5: memref<1x256xf32, #tpu.memory_space<vmem>>, %arg6: memref<8x256xf32, #tpu.memory_space<vmem>>) attributes {dimension_semantics = [#tpu.dimension_semantics<parallel>], iteration_bounds = array<i64: 1>, scalar_prefetch = 0 : i64, scratch_operands = 0 : i64, tpu.core_type = #tpu.core_type<tc>, window_params = [{transform_indices = @transform_0, window_bounds = array<i64: 8, 128>}, {pipeline_mode = #tpu.pipeline_mode<synchronous>, transform_indices = @transform_1, window_bounds = array<i64: 128, 256>}, {pipeline_mode = #tpu.pipeline_mode<synchronous>, transform_indices = @transform_2, window_bounds = array<i64: 256, 256>}, {pipeline_mode = #tpu.pipeline_mode<synchronous>, transform_indices = @transform_3, window_bounds = array<i64: 1, 256>}, {pipeline_mode = #tpu.pipeline_mode<synchronous>, transform_indices = @transform_4, window_bounds = array<i64: 1, 256>}, {transform_indices = @transform_5, window_bounds = array<i64: 8, 256>}]} {
    %c0 = arith.constant 0 : index
    %c0_0 = arith.constant 0 : index
    %0 = vector.load %arg2[%c0, %c0_0] : memref<128x256xf32, #tpu.memory_space<vmem>>, vector<128x256xf32>
    %c0_1 = arith.constant 0 : index
    %c0_2 = arith.constant 0 : index
    %1 = vector.load %arg3[%c0_1, %c0_2] : memref<256x256xf32, #tpu.memory_space<vmem>>, vector<256x256xf32>
    %c0_3 = arith.constant 0 : index
    %c0_4 = arith.constant 0 : index
    %2 = vector.load %arg1[%c0_3, %c0_4] : memref<8x128xf32, #tpu.memory_space<vmem>>, vector<8x128xf32>
    %cst = arith.constant dense<0.000000e+00> : vector<8x256xf32>
    %3 = tpu.matmul %2, %0, %cst {dimension_numbers = #tpu.dot_dimension_numbers<[1], [0], [0], [1], [0, 0, 1, 1], [], []>} : vector<8x128xf32>, vector<128x256xf32>, vector<8x256xf32> -> vector<8x256xf32>
    %4 = arith.mulf %3, %3 : vector<8x256xf32>
    %cst_5 = arith.constant dense<0.000000e+00> : vector<8x256xf32>
    %5 = tpu.matmul %4, %1, %cst_5 {dimension_numbers = #tpu.dot_dimension_numbers<[1], [0], [0], [1], [0, 0, 1, 1], [], []>} : vector<8x256xf32>, vector<256x256xf32>, vector<8x256xf32> -> vector<8x256xf32>
    %cst_6 = arith.constant 9.99999974E-6 : f32
    %6 = vector.broadcast %cst_6 : f32 to vector<8x256xf32>
    %7 = arith.addf %5, %6 : vector<8x256xf32>
    %8 = math.rsqrt %7 : vector<8x256xf32>
    %9 = arith.mulf %3, %8 : vector<8x256xf32>
    %c0_7 = arith.constant 0 : index
    %c0_8 = arith.constant 0 : index
    %10 = vector.load %arg4[%c0_7, %c0_8] : memref<1x256xf32, #tpu.memory_space<vmem>>, vector<1x256xf32>
    %11 = vector.broadcast %10 : vector<1x256xf32> to vector<8x256xf32>
    %12 = arith.mulf %9, %11 : vector<8x256xf32>
    %c0_9 = arith.constant 0 : index
    %c0_10 = arith.constant 0 : index
    %13 = vector.load %arg5[%c0_9, %c0_10] : memref<1x256xf32, #tpu.memory_space<vmem>>, vector<1x256xf32>
    %14 = vector.broadcast %13 : vector<1x256xf32> to vector<8x256xf32>
    %15 = arith.addf %12, %14 : vector<8x256xf32>
    %c0_11 = arith.constant 0 : index
    %c0_12 = arith.constant 0 : index
    %16 = vector.load %arg6[%c0_11, %c0_12] : memref<8x256xf32, #tpu.memory_space<vmem>>, vector<8x256xf32>
    tpu.vector_store %arg6[%c0_11, %c0_12], %15 {strides = array<i32>} : memref<8x256xf32, #tpu.memory_space<vmem>>, vector<8x256xf32>,
    return
  }
  func.func @transform_0(%arg0: i32) -> (i32, i32) {
    %c0_i32 = arith.constant 0 : i32
    %c0_i32_0 = arith.constant 0 : i32
    return %arg0, %c0_i32 : i32, i32
  }
  func.func @transform_1(%arg0: i32) -> (i32, i32) {
    %c0_i32 = arith.constant 0 : i32
    %c0_i32_0 = arith.constant 0 : i32
    %c0_i32_1 = arith.constant 0 : i32
    return %c0_i32, %c0_i32_0 : i32, i32
  }
  func.func @transform_2(%arg0: i32) -> (i32, i32) {
    %c0_i32 = arith.constant 0 : i32
    %c0_i32_0 = arith.constant 0 : i32
    %c0_i32_1 = arith.constant 0 : i32
    return %c0_i32, %c0_i32_0 : i32, i32
  }
  func.func @transform_3(%arg0: i32) -> (i32, i32) {
    %c0_i32 = arith.constant 0 : i32
    %c0_i32_0 = arith.constant 0 : i32
    %c0_i32_1 = arith.constant 0 : i32
    return %c0_i32, %c0_i32_0 : i32, i32
  }
  func.func @transform_4(%arg0: i32) -> (i32, i32) {
    %c0_i32 = arith.constant 0 : i32
    %c0_i32_0 = arith.constant 0 : i32
    %c0_i32_1 = arith.constant 0 : i32
    return %c0_i32, %c0_i32_0 : i32, i32
  }
  func.func @transform_5(%arg0: i32) -> (i32, i32) {
    %c0_i32 = arith.constant 0 : i32
    %c0_i32_0 = arith.constant 0 : i32
    return %arg0, %c0_i32 : i32, i32
  }
}

</mosaic_0001>

<llo_original>
// kernel: tpu_custom_call.1
$region0: #{tpu_custom_call.1}
  #allocation0 [shape = 'u32[]', space=smem, size = 0x4, offset = 0x4, fixed_abs, tag = 'smem constant byte address 0x4 - core index']
  #allocation1 [shape = 'u32[144,128]{1,0:T(1,128)}', space=vmem, size = 0x12000, scoped, tag = 'internal scratch']
  %s0 = inlined_call_operand.hbm [shape: f32[8,128], index: 0, kind: input, shape index: {}]
  %s1 = inlined_call_operand.hbm [shape: f32[128,256], index: 1, kind: input, shape index: {}]
  %s2 = inlined_call_operand.hbm [shape: f32[256,256], index: 2, kind: input, shape index: {}]
  %s3 = inlined_call_operand.vmem [shape: f32[1,256], index: 3, kind: input, shape index: {}]
  %s4 = inlined_call_operand.vmem [shape: f32[1,256], index: 4, kind: input, shape index: {}]
  %s5 = inlined_call_operand.hbm [shape: f32[8,256], index: 5, kind: output, shape index: {}]
  %s6 = sld [smem:[#allocation0]]
  $region42: #{tpu_custom_call.1} parent=0
    _
  %s8 = ssub.s32 1, %s6
  %s9 = scalar_select 0, %s8, %s6
  $region1: #{tpu_custom_call.1} parent=0
    #allocation2 [shape = 'u8[4096]{0}', space=vmem, size = 0x1000, scoped, tag = 'input window, operand 0, single buffered']
    #allocation3 [shape = 's32[1]{0}', space=sflag, size = 0x4, scoped, tag = 'scoped memory for tpu_custom_call.1']
    #allocation4 [shape = 's32[1]{0}', space=sflag, size = 0x4, scoped, tag = 'scoped memory for tpu_custom_call.1']
    #allocation5 [shape = 'u8[131072]{0}', space=vmem, size = 0x20000, scoped, tag = 'input window, operand 1, single buffered']
    #allocation6 [shape = 's32[1]{0}', space=sflag, size = 0x4, scoped, tag = 'scoped memory for tpu_custom_call.1']
    #allocation7 [shape = 'u8[262144]{0}', space=vmem, size = 0x40000, scoped, tag = 'input window, operand 2, single buffered']
    #allocation8 [shape = 'u8[8192]{0}', space=vmem, size = 0x2000, scoped, tag = 'output window, operand 0, single buffered']
    %10 = vsyncpa [#allocation3], 0
    %11 = vsyncpa [#allocation6], 0
    %12 = vsyncpa [#allocation4], 0
    // Predicated region
    $region2: #{tpu_custom_call.1} parent=1 // pred_check
      _
    $region3: #{tpu_custom_call.1} parent=1 // pred_check_branch
      %14 = sbr.rel (0) target = $region5
    $region4: #{tpu_custom_call.1} parent=1 // pred_region
      %s16 = ssub.s32 128, 128
      %17 = vsyncadd [#allocation3], %s16
      %s19 = sshll.u32 [#allocation2], 4
      %s20 = int_to_ptr.vmem [resolvable:$true] %s19
      %22 = dma.hbm_to_vmem [thread:$0]  %s0, 128, %s20, [#allocation3]
    $region5: #{tpu_custom_call.1} parent=1 // pred_fallthru
      _
    // Predicated region
    $region6: #{tpu_custom_call.1} parent=1 // pred_check
      _
    $region7: #{tpu_custom_call.1} parent=1 // pred_check_branch
      %24 = sbr.rel (0) target = $region9
    $region8: #{tpu_custom_call.1} parent=1 // pred_region
      %s26 = ssub.s32 4096, 4096
      %27 = vsyncadd [#allocation6], %s26
      %s28 = sshll.u32 [#allocation5], 4
      %s29 = int_to_ptr.vmem [resolvable:$true] %s28
      %34 = dma.hbm_to_vmem [thread:$0]  %s1, 4096, %s29, [#allocation6], 256, 256, 16
    $region9: #{tpu_custom_call.1} parent=1 // pred_fallthru
      _
    // Predicated region
    $region10: #{tpu_custom_call.1} parent=1 // pred_check
      _
    $region11: #{tpu_custom_call.1} parent=1 // pred_check_branch
      %36 = sbr.rel (0) target = $region13
    $region12: #{tpu_custom_call.1} parent=1 // pred_region
      %s38 = ssub.s32 8192, 8192
      %39 = vsyncadd [#allocation6], %s38
      %s40 = sshll.u32 [#allocation7], 4
      %s41 = int_to_ptr.vmem [resolvable:$true] %s40
      %46 = dma.hbm_to_vmem [thread:$0]  %s2, 8192, %s41, [#allocation6], 256, 256, 16
    $region13: #{tpu_custom_call.1} parent=1 // pred_fallthru
      _
    // Predicated region
    $region14: #{tpu_custom_call.1} parent=1 // pred_check
      _
    $region15: #{tpu_custom_call.1} parent=1 // pred_check_branch
      %48 = sbr.rel (0) target = $region17
    $region16: #{tpu_custom_call.1} parent=1 // pred_region
      _
    $region17: #{tpu_custom_call.1} parent=1 // pred_fallthru
      _
    // Predicated region
    $region18: #{tpu_custom_call.1} parent=1 // pred_check
      _
    $region19: #{tpu_custom_call.1} parent=1 // pred_check_branch
      %50 = sbr.rel (0) target = $region21
    $region20: #{tpu_custom_call.1} parent=1 // pred_region
      _
    $region21: #{tpu_custom_call.1} parent=1 // pred_fallthru
      _
    // Predicated region
    $region22: #{tpu_custom_call.1} parent=1 // pred_check
      _
    $region23: #{tpu_custom_call.1} parent=1 // pred_check_branch
      %52 = sbr.rel (0) target = $region25
    $region24: #{tpu_custom_call.1} parent=1 // pred_region
      %53 = dma.done [#allocation3], 128
    $region25: #{tpu_custom_call.1} parent=1 // pred_fallthru
      _
    // Predicated region
    $region26: #{tpu_custom_call.1} parent=1 // pred_check
      _
    $region27: #{tpu_custom_call.1} parent=1 // pred_check_branch
      %55 = sbr.rel (0) target = $region29
    $region28: #{tpu_custom_call.1} parent=1 // pred_region
      %56 = dma.done [#allocation6], 4096
    $region29: #{tpu_custom_call.1} parent=1 // pred_fallthru
      _
    // Predicated region
    $region30: #{tpu_custom_call.1} parent=1 // pred_check
      _
    $region31: #{tpu_custom_call.1} parent=1 // pred_check_branch
      %58 = sbr.rel (0) target = $region33
    $region32: #{tpu_custom_call.1} parent=1 // pred_region
      %59 = dma.done [#allocation6], 8192
    $region33: #{tpu_custom_call.1} parent=1 // pred_fallthru
      _
    %v60 = vld [vmem:[#allocation5] sm:$0xff]
    %v61 = vld [vmem:[#allocation5 + $0x8] sm:$0xff]
    %v62 = vld [vmem:[#allocation5 + $0x10] sm:$0xff]
    %v63 = vld [vmem:[#allocation5 + $0x18] sm:$0xff]
    %v64 = vld [vmem:[#allocation5 + $0x20] sm:$0xff]
    %v65 = vld [vmem:[#allocation5 + $0x28] sm:$0xff]
    %v66 = vld [vmem:[#allocation5 + $0x30] sm:$0xff]
    %v67 = vld [vmem:[#allocation5 + $0x38] sm:$0xff]
    %v68 = vld [vmem:[#allocation5 + $0x40] sm:$0xff]
    %v69 = vld [vmem:[#allocation5 + $0x48] sm:$0xff]
    %v70 = vld [vmem:[#allocation5 + $0x50] sm:$0xff]
    %v71 = vld [vmem:[#allocation5 + $0x58] sm:$0xff]
    %v72 = vld [vmem:[#allocation5 + $0x60] sm:$0xff]
    %v73 = vld [vmem:[#allocation5 + $0x68] sm:$0xff]
    %v74 = vld [vmem:[#allocation5 + $0x70] sm:$0xff]
    %v75 = vld [vmem:[#allocation5 + $0x78] sm:$0xff]
    %v76 = vld [vmem:[#allocation5 + $0x80] sm:$0xff]
    %v77 = vld [vmem:[#allocation5 + $0x88] sm:$0xff]
    %v78 = vld [vmem:[#allocation5 + $0x90] sm:$0xff]
    %v79 = vld [vmem:[#allocation5 + $0x98] sm:$0xff]
    %v80 = vld [vmem:[#allocation5 + $0xa0] sm:$0xff]
    %v81 = vld [vmem:[#allocation5 + $0xa8] sm:$0xff]
    %v82 = vld [vmem:[#allocation5 + $0xb0] sm:$0xff]
    %v83 = vld [vmem:[#allocation5 + $0xb8] sm:$0xff]
    %v84 = vld [vmem:[#allocation5 + $0xc0] sm:$0xff]
    %v85 = vld [vmem:[#allocation5 + $0xc8] sm:$0xff]
    %v86 = vld [vmem:[#allocation5 + $0xd0] sm:$0xff]
    %v87 = vld [vmem:[#allocation5 + $0xd8] sm:$0xff]
    %v88 = vld [vmem:[#allocation5 + $0xe0] sm:$0xff]
    %v89 = vld [vmem:[#allocation5 + $0xe8] sm:$0xff]
    %v90 = vld [vmem:[#allocation5 + $0xf0] sm:$0xff]
    %v91 = vld [vmem:[#allocation5 + $0xf8] sm:$0xff]
    %v92 = vld [vmem:[#allocation7] sm:$0xff]
    %v93 = vld [vmem:[#allocation7 + $0x8] sm:$0xff]
    %v94 = vld [vmem:[#allocation7 + $0x10] sm:$0xff]
    %v95 = vld [vmem:[#allocation7 + $0x18] sm:$0xff]
    %v96 = vld [vmem:[#allocation7 + $0x20] sm:$0xff]
    %v97 = vld [vmem:[#allocation7 + $0x28] sm:$0xff]
    %v98 = vld [vmem:[#allocation7 + $0x30] sm:$0xff]
    %v99 = vld [vmem:[#allocation7 + $0x38] sm:$0xff]
    %v100 = vld [vmem:[#allocation7 + $0x40] sm:$0xff]
    %v101 = vld [vmem:[#allocation7 + $0x48] sm:$0xff]
    %v102 = vld [vmem:[#allocation7 + $0x50] sm:$0xff]
    %v103 = vld [vmem:[#allocation7 + $0x58] sm:$0xff]
    %v104 = vld [vmem:[#allocation7 + $0x60] sm:$0xff]
    %v105 = vld [vmem:[#allocation7 + $0x68] sm:$0xff]
    %v106 = vld [vmem:[#allocation7 + $0x70] sm:$0xff]
    %v107 = vld [vmem:[#allocation7 + $0x78] sm:$0xff]
    %v108 = vld [vmem:[#allocation7 + $0x80] sm:$0xff]
    %v109 = vld [vmem:[#allocation7 + $0x88] sm:$0xff]
    %v110 = vld [vmem:[#allocation7 + $0x90] sm:$0xff]
    %v111 = vld [vmem:[#allocation7 + $0x98] sm:$0xff]
    %v112 = vld [vmem:[#allocation7 + $0xa0] sm:$0xff]
    %v113 = vld [vmem:[#allocation7 + $0xa8] sm:$0xff]
    %v114 = vld [vmem:[#allocation7 + $0xb0] sm:$0xff]
    %v115 = vld [vmem:[#allocation7 + $0xb8] sm:$0xff]
    %v116 = vld [vmem:[#allocation7 + $0xc0] sm:$0xff]
    %v117 = vld [vmem:[#allocation7 + $0xc8] sm:$0xff]
    %v118 = vld [vmem:[#allocation7 + $0xd0] sm:$0xff]
    %v119 = vld [vmem:[#allocation7 + $0xd8] sm:$0xff]
    %v120 = vld [vmem:[#allocation7 + $0xe0] sm:$0xff]
    %v121 = vld [vmem:[#allocation7 + $0xe8] sm:$0xff]
    %v122 = vld [vmem:[#allocation7 + $0xf0] sm:$0xff]
    %v123 = vld [vmem:[#allocation7 + $0xf8] sm:$0xff]
    %v124 = vld [vmem:[#allocation7 + $0x100] sm:$0xff]
    %v125 = vld [vmem:[#allocation7 + $0x108] sm:$0xff]
    %v126 = vld [vmem:[#allocation7 + $0x110] sm:$0xff]
    %v127 = vld [vmem:[#allocation7 + $0x118] sm:$0xff]
    %v128 = vld [vmem:[#allocation7 + $0x120] sm:$0xff]
    %v129 = vld [vmem:[#allocation7 + $0x128] sm:$0xff]
    %v130 = vld [vmem:[#allocation7 + $0x130] sm:$0xff]
    %v131 = vld [vmem:[#allocation7 + $0x138] sm:$0xff]
    %v132 = vld [vmem:[#allocation7 + $0x140] sm:$0xff]
    %v133 = vld [vmem:[#allocation7 + $0x148] sm:$0xff]
    %v134 = vld [vmem:[#allocation7 + $0x150] sm:$0xff]
    %v135 = vld [vmem:[#allocation7 + $0x158] sm:$0xff]
    %v136 = vld [vmem:[#allocation7 + $0x160] sm:$0xff]
    %v137 = vld [vmem:[#allocation7 + $0x168] sm:$0xff]
    %v138 = vld [vmem:[#allocation7 + $0x170] sm:$0xff]
    %v139 = vld [vmem:[#allocation7 + $0x178] sm:$0xff]
    %v140 = vld [vmem:[#allocation7 + $0x180] sm:$0xff]
    %v141 = vld [vmem:[#allocation7 + $0x188] sm:$0xff]
    %v142 = vld [vmem:[#allocation7 + $0x190] sm:$0xff]
    %v143 = vld [vmem:[#allocation7 + $0x198] sm:$0xff]
    %v144 = vld [vmem:[#allocation7 + $0x1a0] sm:$0xff]
    %v145 = vld [vmem:[#allocation7 + $0x1a8] sm:$0xff]
    %v146 = vld [vmem:[#allocation7 + $0x1b0] sm:$0xff]
    %v147 = vld [vmem:[#allocation7 + $0x1b8] sm:$0xff]
    %v148 = vld [vmem:[#allocation7 + $0x1c0] sm:$0xff]
    %v149 = vld [vmem:[#allocation7 + $0x1c8] sm:$0xff]
    %v150 = vld [vmem:[#allocation7 + $0x1d0] sm:$0xff]
    %v151 = vld [vmem:[#allocation7 + $0x1d8] sm:$0xff]
    %v152 = vld [vmem:[#allocation7 + $0x1e0] sm:$0xff]
    %v153 = vld [vmem:[#allocation7 + $0x1e8] sm:$0xff]
    %v154 = vld [vmem:[#allocation7 + $0x1f0] sm:$0xff]
    %v155 = vld [vmem:[#allocation7 + $0x1f8] sm:$0xff]
    %v156 = vld [vmem:[#allocation2] sm:$0xff]
    %157 = vmatprep.subr.mxu0 %v61
    %158 = vmatpush1.msra.mxu0 %v60
    %159 = vmatprep.subr.mxu0 %v63
    %160 = vmatpush1.msra.mxu0 %v62
    %161 = vmatprep.subr.mxu0 %v65
    %162 = vmatpush1.msra.mxu0 %v64
    %163 = vmatprep.subr.mxu0 %v67
    %164 = vmatpush1.msra.mxu0 %v66
    %165 = vmatprep.subr.mxu0 %v69
    %166 = vmatpush1.msra.mxu0 %v68
    %167 = vmatprep.subr.mxu0 %v71
    %168 = vmatpush1.msra.mxu0 %v70
    %169 = vmatprep.subr.mxu0 %v73
    %170 = vmatpush1.msra.mxu0 %v72
    %171 = vmatprep.subr.mxu0 %v75
    %172 = vmatpush1.msra.mxu0 %v74
    %173 = vmatprep.subr.mxu0 %v77
    %174 = vmatpush1.msra.mxu0 %v76
    %175 = vmatprep.subr.mxu0 %v79
    %176 = vmatpush1.msra.mxu0 %v78
    %177 = vmatprep.subr.mxu0 %v81
    %178 = vmatpush1.msra.mxu0 %v80
    %179 = vmatprep.subr.mxu0 %v83
    %180 = vmatpush1.msra.mxu0 %v82
    %181 = vmatprep.subr.mxu0 %v85
    %182 = vmatpush1.msra.mxu0 %v84
    %183 = vmatprep.subr.mxu0 %v87
    %184 = vmatpush1.msra.mxu0 %v86
    %185 = vmatprep.subr.mxu0 %v89
    %186 = vmatpush1.msra.mxu0 %v88
    %187 = vmatprep.subr.mxu0 %v91
    %188 = vmatpush1.msra.mxu0 %v90
    %189 = vmatprep.subr.mxu0 0.0
    %190 = vmatpush1.msra.mxu0 0.0
    %191 = vmatprep.subr.mxu0 0.0
    %192 = vmatpush1.msra.mxu0 0.0
    %193 = vmatprep.subr.mxu0 0.0
    %194 = vmatpush1.msra.mxu0 0.0
    %195 = vmatprep.subr.mxu0 0.0
    %196 = vmatpush1.msra.mxu0 0.0
    %197 = vmatprep.subr.mxu0 0.0
    %198 = vmatpush1.msra.mxu0 0.0
    %199 = vmatprep.subr.mxu0 0.0
    %200 = vmatpush1.msra.mxu0 0.0
    %201 = vmatprep.subr.mxu0 0.0
    %202 = vmatpush1.msra.mxu0 0.0
    %203 = vmatprep.subr.mxu0 0.0
    %204 = vmatpush1.msra.mxu0 0.0
    %205 = vmatprep.subr.mxu0 0.0
    %206 = vmatpush1.msra.mxu0 0.0
    %207 = vmatprep.subr.mxu0 0.0
    %208 = vmatpush1.msra.mxu0 0.0
    %209 = vmatprep.subr.mxu0 0.0
    %210 = vmatpush1.msra.mxu0 0.0
    %211 = vmatprep.subr.mxu0 0.0
    %212 = vmatpush1.msra.mxu0 0.0
    %213 = vmatprep.subr.mxu0 0.0
    %214 = vmatpush1.msra.mxu0 0.0
    %215 = vmatprep.subr.mxu0 0.0
    %216 = vmatpush1.msra.mxu0 0.0
    %217 = vmatprep.subr.mxu0 0.0
    %218 = vmatpush1.msra.mxu0 0.0
    %219 = vmatprep.subr.mxu0 0.0
    %220 = vmatpush1.msra.mxu0 0.0
    %221 = vmatprep.mubr.f32.mxu0 0.0
    %222 = vmatmul.mubr.f32.gmra.mrb[0].mxu0 %v156
    %v223 = vpop.f32.mrb[0].mxu0
    %v224 = vadd.f32 0.0, %v223
    %v225 = vpop.f32.mrb[0].mxu0
    %v226 = vadd.f32 0.0, %v225
    %227 = vdwg.mxu0
    %v228 = vmul.f32 %v224, %v224
    %v229 = vmul.f32 %v226, %v226
    %230 = vmatprep.subr.mxu0 %v93
    %231 = vmatpush1.msra.mxu0 %v92
    %232 = vmatprep.subr.mxu0 %v95
    %233 = vmatpush1.msra.mxu0 %v94
    %234 = vmatprep.subr.mxu0 %v97
    %235 = vmatpush1.msra.mxu0 %v96
    %236 = vmatprep.subr.mxu0 %v99
    %237 = vmatpush1.msra.mxu0 %v98
    %238 = vmatprep.subr.mxu0 %v101
    %239 = vmatpush1.msra.mxu0 %v100
    %240 = vmatprep.subr.mxu0 %v103
    %241 = vmatpush1.msra.mxu0 %v102
    %242 = vmatprep.subr.mxu0 %v105
    %243 = vmatpush1.msra.mxu0 %v104
    %244 = vmatprep.subr.mxu0 %v107
    %245 = vmatpush1.msra.mxu0 %v106
    %246 = vmatprep.subr.mxu0 %v109
    %247 = vmatpush1.msra.mxu0 %v108
    %248 = vmatprep.subr.mxu0 %v111
    %249 = vmatpush1.msra.mxu0 %v110
    %250 = vmatprep.subr.mxu0 %v113
    %251 = vmatpush1.msra.mxu0 %v112
    %252 = vmatprep.subr.mxu0 %v115
    %253 = vmatpush1.msra.mxu0 %v114
    %254 = vmatprep.subr.mxu0 %v117
    %255 = vmatpush1.msra.mxu0 %v116
    %256 = vmatprep.subr.mxu0 %v119
    %257 = vmatpush1.msra.mxu0 %v118
    %258 = vmatprep.subr.mxu0 %v121
    %259 = vmatpush1.msra.mxu0 %v120
    %260 = vmatprep.subr.mxu0 %v123
    %261 = vmatpush1.msra.mxu0 %v122
    %262 = vmatprep.subr.mxu0 %v125
    %263 = vmatpush1.msra.mxu0 %v124
    %264 = vmatprep.subr.mxu0 %v127
    %265 = vmatpush1.msra.mxu0 %v126
    %266 = vmatprep.subr.mxu0 %v129
    %267 = vmatpush1.msra.mxu0 %v128
    %268 = vmatprep.subr.mxu0 %v131
    %269 = vmatpush1.msra.mxu0 %v130
    %270 = vmatprep.subr.mxu0 %v133
    %271 = vmatpush1.msra.mxu0 %v132
    %272 = vmatprep.subr.mxu0 %v135
    %273 = vmatpush1.msra.mxu0 %v134
    %274 = vmatprep.subr.mxu0 %v137
    %275 = vmatpush1.msra.mxu0 %v136
    %276 = vmatprep.subr.mxu0 %v139
    %277 = vmatpush1.msra.mxu0 %v138
    %278 = vmatprep.subr.mxu0 %v141
    %279 = vmatpush1.msra.mxu0 %v140
    %280 = vmatprep.subr.mxu0 %v143
    %281 = vmatpush1.msra.mxu0 %v142
    %282 = vmatprep.subr.mxu0 %v145
    %283 = vmatpush1.msra.mxu0 %v144
    %284 = vmatprep.subr.mxu0 %v147
    %285 = vmatpush1.msra.mxu0 %v146
    %286 = vmatprep.subr.mxu0 %v149
    %287 = vmatpush1.msra.mxu0 %v148
    %288 = vmatprep.subr.mxu0 %v151
    %289 = vmatpush1.msra.mxu0 %v150
    %290 = vmatprep.subr.mxu0 %v153
    %291 = vmatpush1.msra.mxu0 %v152
    %292 = vmatprep.subr.mxu0 %v155
    %293 = vmatpush1.msra.mxu0 %v154
    %294 = vmatprep.mubr.f32.mxu0 %v229
    %295 = vmatmul.mubr.f32.gmra.mrb[0].mxu0 %v228
    %v296 = vpop.f32.mrb[0].mxu0
    %v297 = vadd.f32 1e-05, %v296
    %v298 = vpop.f32.mrb[0].mxu0
    %v299 = vadd.f32 1e-05, %v298
    %300 = vdwg.mxu0
    %v301 = vrsqrt.pop %v297
    %v302 = vrsqrt.pop %v299
    %v303 = vmul.f32 %v224, %v301
    %v304 = vmul.f32 %v226, %v302
    %v305 = vld [vmem:[%s3] sm:$0x3]
    %v307 = vlaneseq
    %v308 = vshrl.u32 %v307, 7
    %v309 = vsub.s32 0, %v308
    %v310 = vrot.slane %v305, %v309
    %v311 = vlaneseq
    %v312 = vshrl.u32 %v311, 7
    %v313 = vsub.s32 1, %v312
    %v314 = vrot.slane %v305, %v313
    %v317 = vmul.f32 %v303, %v310
    %v318 = vmul.f32 %v304, %v314
    %v319 = vld [vmem:[%s4] sm:$0x3]
    %v321 = vlaneseq
    %v322 = vshrl.u32 %v321, 7
    %v323 = vsub.s32 0, %v322
    %v324 = vrot.slane %v319, %v323
    %v325 = vlaneseq
    %v326 = vshrl.u32 %v325, 7
    %v327 = vsub.s32 1, %v326
    %v328 = vrot.slane %v319, %v327
    %v331 = vadd.f32 %v317, %v324
    %v332 = vadd.f32 %v318, %v328
    %333 = vst [vmem:[#allocation8] sm:$0xff] %v331
    %334 = vst [vmem:[#allocation8 + $0x8] sm:$0xff] %v332
    // Predicated region
    $region34: #{tpu_custom_call.1} parent=1 // pred_check
      _
    $region35: #{tpu_custom_call.1} parent=1 // pred_check_branch
      %336 = sbr.rel (0) target = $region37
    $region36: #{tpu_custom_call.1} parent=1 // pred_region
      %s338 = ssub.s32 256, 256
      %339 = vsyncadd [#allocation4], %s338
      %s341 = sshll.u32 [#allocation8], 4
      %s342 = int_to_ptr.vmem [resolvable:$true] %s341
      %344 = dma.vmem_to_hbm [thread:$0]  %s342, 256, %s5, [#allocation4]
    $region37: #{tpu_custom_call.1} parent=1 // pred_fallthru
      _
    // Predicated region
    $region38: #{tpu_custom_call.1} parent=1 // pred_check
      _
    $region39: #{tpu_custom_call.1} parent=1 // pred_check_branch
      %346 = sbr.rel (0) target = $region41
    $region40: #{tpu_custom_call.1} parent=1 // pred_region
      %347 = dma.done [#allocation4], 256
    $region41: #{tpu_custom_call.1} parent=1 // pred_fallthru
      _
    %348 = vsyncpa [#allocation3], 1
    %349 = vsyncpa [#allocation6], 1
    %350 = vsyncpa [#allocation4], 1

</llo_original>
